<compile_context>
chip_gen: v6e
topology: v6e:2x2x1
jax: 0.10.0
libtpu: 0.0.40
codegen_flags: <defaults>
</compile_context>

<pallas_src>
import jax
import jax.numpy as jnp
from jax import lax
from jax.experimental import pallas as pl
from jax.experimental.pallas import tpu as pltpu


# ----------------------------------------------------------------------------
# Fused kernel: one batch block -> QKV projection, per-head softmax attention,
# output projection, all in VMEM / vregs.
# ----------------------------------------------------------------------------
def _make_fused_attention_kernel(block_b, seq_len, heads, dim_head):
    inner = heads * dim_head

    def kernel(x_ref, wqkv_ref, wo_ref, o_ref):
        # x_ref   : (block_b, N, D_in)   f32
        # wqkv_ref: (D_in, 3 * inner)    bf16   [Wq*scale | Wk | Wv]
        # wo_ref  : (inner, D_out)       bf16
        # o_ref   : (block_b, N, D_out)  f32
        d_in = x_ref.shape[-1]
        rows = block_b * seq_len

        # ---- fused Q/K/V projection: single wide MXU matmul, f32 accumulation ----
        x = x_ref[...].reshape(rows, d_in).astype(jnp.bfloat16)
        qkv = jnp.dot(x, wqkv_ref[...], preferred_element_type=jnp.float32)  # (rows, 3*inner)

        # ---- per batch element / per head: scores, softmax, P@V ----
        # TODO(synk): flash-style online-softmax KV loop once N grows.
        batch_outs = []
        for b in range(block_b):                       # static, small
            r0 = b * seq_len
            head_outs = []
            for h in range(heads):                     # static, small (heads=4)
                c0 = h * dim_head
                qh = qkv[r0:r0 + seq_len, c0:c0 + dim_head].astype(jnp.bfloat16)
                kh = qkv[r0:r0 + seq_len,
                         inner + c0:inner + c0 + dim_head].astype(jnp.bfloat16)
                vh = qkv[r0:r0 + seq_len,
                         2 * inner + c0:2 * inner + c0 + dim_head].astype(jnp.bfloat16)

                # scores = q @ k^T (scale already folded into Wq); contract last
                # dims directly — no materialized transpose.
                s = lax.dot_general(qh, kh, (((1,), (1,)), ((), ())),
                                    preferred_element_type=jnp.float32)   # (N, N) f32

                # numerically stable softmax over the key axis
                m = jnp.max(s, axis=-1, keepdims=True)
                p = jnp.exp(s - m)
                denom = jnp.sum(p, axis=-1, keepdims=True)
                p = (p * pl.reciprocal(denom, approx=True)).astype(jnp.bfloat16)  # EUP

                head_outs.append(
                    jnp.dot(p, vh, preferred_element_type=jnp.float32))   # (N, Dh)
            batch_outs.append(jnp.concatenate(head_outs, axis=-1))        # (N, inner)

        attn = jnp.concatenate(batch_outs, axis=0).astype(jnp.bfloat16)   # (rows, inner)

        # ---- fused output projection across all heads (single MXU matmul) ----
        out = jnp.dot(attn, wo_ref[...], preferred_element_type=jnp.float32)
        o_ref[...] = out.reshape(block_b, seq_len, -1).astype(o_ref.dtype)

    return kernel


def _pick_block_b(batch, seq_len, rows_target=256):
    """Fold multiple batch elements into one grid step (bigger MXU M-dim) while
    keeping >= 2 'parallel' grid steps whenever B >= 2 (v7x has 2 TensorCores)."""
    if batch <= 1:
        return 1
    cap = max(1, batch // 2)                          # leave >= 2 grid steps
    bb = max(1, min(cap, rows_target // max(seq_len, 1)))
    while batch % bb:                                 # must divide batch evenly
        bb -= 1
    return bb


def fused_attention_forward(x, wqkv_bf16, wo_bf16, *, heads, dim_head, block_b=None):
    """x: (B, N, D_in) f32; wqkv_bf16: (D_in, 3*H*Dh) bf16; wo_bf16: (H*Dh, D_out) bf16."""
    B, N, D_in = x.shape
    inner = heads * dim_head
    D_out = wo_bf16.shape[-1]
    bb = _pick_block_b(B, N) if block_b is None else block_b
    assert B % bb == 0, "block_b must divide the batch size"

    kernel = _make_fused_attention_kernel(bb, N, heads, dim_head)
    const2 = lambda i: (0, 0)   # constant index map -> weights fetched once

    return pl.pallas_call(
        kernel,
        out_shape=jax.ShapeDtypeStruct((B, N, D_out), x.dtype),
        grid_spec=pltpu.PrefetchScalarGridSpec(
            num_scalar_prefetch=0,
            grid=(B // bb,),
            in_specs=[
                pl.BlockSpec((bb, N, D_in), lambda i: (i, 0, 0)),
                pl.BlockSpec((D_in, 3 * inner), const2),
                pl.BlockSpec((inner, D_out), const2),
            ],
            out_specs=pl.BlockSpec((bb, N, D_out), lambda i: (i, 0, 0)),
        ),
        compiler_params=pltpu.CompilerParams(
            dimension_semantics=("parallel",),
            # re-derive when scaling N / dim; kept below v7x's 64 MiB physical VMEM
            vmem_limit_bytes=32 * 1024 * 1024,
        ),
    )(x, wqkv_bf16, wo_bf16)


# ----------------------------------------------------------------------------
# Module wrapper
# ----------------------------------------------------------------------------
class AttentionPallas:
    """Mirrors scoreperformer Attention with default flags (non-causal,
    multi-kv-head, no mem kv, no alibi). Kernel runs bf16 MXU / f32 accumulate."""

    def __init__(self, dim, dim_head=16, heads=4, key=None):
        self.dim = dim
        self.dim_head = dim_head
        self.heads = heads
        self.scale = dim_head ** (-0.5)
        inner = dim_head * heads

        key = jax.random.PRNGKey(0) if key is None else key
        kq, kk, kv, ko = jax.random.split(key, 4)
        # weights stored as (in_features, out_features): forward is x @ W
        init = lambda k, shape: (0.02 * jax.random.normal(k, shape)).astype(jnp.float32)
        self.w_q = init(kq, (dim, inner))
        self.w_k = init(kk, (dim, inner))
        self.w_v = init(kv, (dim, inner))
        self.w_o = init(ko, (inner, dim))

        # One-time host-side prep for the fused kernel:
        #  - softmax scale folded into W_q (linear, so equivalent)
        #  - Q/K/V projections concatenated into a single (D_in, 3*inner) matrix
        #  - bf16 storage (MXU operands); f32 masters kept for the reference.
        wqkv = jnp.concatenate([self.w_q * self.scale, self.w_k, self.w_v], axis=1)
        self.wqkv_bf16 = wqkv.astype(jnp.bfloat16)
        self.wo_bf16 = self.w_o.astype(jnp.bfloat16)

    def __call__(self, x, block_b=None):
        # x: (B, N, dim) float32 -> (B, N, dim) float32
        return fused_attention_forward(
            x, self.wqkv_bf16, self.wo_bf16,
            heads=self.heads, dim_head=self.dim_head, block_b=block_b,
        )

    # pure-JAX f32 reference (mirrors the PyTorch forward) for verification
    def reference(self, x):
        B, N, D = x.shape
        H, Dh = self.heads, self.dim_head
        q = (x @ self.w_q).reshape(B, N, H, Dh).transpose(0, 2, 1, 3)
        k = (x @ self.w_k).reshape(B, N, H, Dh).transpose(0, 2, 1, 3)
        v = (x @ self.w_v).reshape(B, N, H, Dh).transpose(0, 2, 1, 3)
        s = jnp.einsum("bhid,bhjd->bhij", q, k) * self.scale
        p = jax.nn.softmax(s, axis=-1)
        o = jnp.einsum("bhij,bhjd->bhid", p, v)
        o = o.transpose(0, 2, 1, 3).reshape(B, N, H * Dh)
        return o @ self.w_o


if __name__ == "__main__":
    B, N, DIM, HEADS, DIM_HEAD = 2, 8, 32, 4, 16

    key = jax.random.PRNGKey(0)
    k_x, k_w = jax.random.split(key)
    x = jax.random.normal(k_x, (B, N, DIM), dtype=jnp.float32)

    attn = AttentionPallas(dim=DIM, dim_head=DIM_HEAD, heads=HEADS, key=k_w)

    out = attn(x)
    out = jax.block_until_ready(out)

    ref = attn.reference(x)
    assert out.shape == (B, N, DIM)
    # Kernel uses bf16 MXU operands (f32 accumulation) and an approx (EUP)
    # reciprocal in the softmax denominator; tolerances reflect bf16 rounding
    # of inputs/weights vs. the pure-f32 reference.
    assert jnp.allclose(out, ref, atol=3e-3, rtol=3e-2), "mismatch vs reference"

    print("KERNEL_OK")
</pallas_src>

<mosaic_0001>
module attributes {stable_mosaic.version = 11 : i64} {
  func.func @kernel(%arg0: i32, %arg1: memref<1x8x32xf32, #tpu.memory_space<vmem>>, %arg2: memref<32x192xbf16, #tpu.memory_space<vmem>>, %arg3: memref<64x32xbf16, #tpu.memory_space<vmem>>, %arg4: memref<1x8x32xf32, #tpu.memory_space<vmem>>) attributes {dimension_semantics = [#tpu.dimension_semantics<parallel>], iteration_bounds = array<i64: 2>, scalar_prefetch = 0 : i64, scratch_operands = 0 : i64, tpu.core_type = #tpu.core_type<tc>, window_params = [{transform_indices = @transform_0, window_bounds = array<i64: 1, 8, 32>}, {pipeline_mode = #tpu.pipeline_mode<synchronous>, transform_indices = @transform_1, window_bounds = array<i64: 32, 192>}, {pipeline_mode = #tpu.pipeline_mode<synchronous>, transform_indices = @transform_2, window_bounds = array<i64: 64, 32>}, {transform_indices = @transform_3, window_bounds = array<i64: 1, 8, 32>}]} {
    %c0 = arith.constant 0 : index
    %c0_0 = arith.constant 0 : index
    %c0_1 = arith.constant 0 : index
    %0 = vector.load %arg1[%c0, %c0_0, %c0_1] : memref<1x8x32xf32, #tpu.memory_space<vmem>>, vector<1x8x32xf32>
    %1 = vector.shape_cast %0 : vector<1x8x32xf32> to vector<8x32xf32>
    %2 = arith.truncf %1 : vector<8x32xf32> to vector<8x32xbf16>
    %c0_2 = arith.constant 0 : index
    %c0_3 = arith.constant 0 : index
    %3 = vector.load %arg2[%c0_2, %c0_3] : memref<32x192xbf16, #tpu.memory_space<vmem>>, vector<32x192xbf16>
    %cst = arith.constant dense<0.000000e+00> : vector<8x192xf32>
    %4 = tpu.matmul %2, %3, %cst {dimension_numbers = #tpu.dot_dimension_numbers<[1], [0], [0], [1], [0, 0, 1, 1], [], []>} : vector<8x32xbf16>, vector<32x192xbf16>, vector<8x192xf32> -> vector<8x192xf32>
    %5 = vector.extract_strided_slice %4 {offsets = [0, 0], sizes = [8, 16], strides = [1, 1]} : vector<8x192xf32> to vector<8x16xf32>
    %6 = arith.truncf %5 : vector<8x16xf32> to vector<8x16xbf16>
    %7 = vector.extract_strided_slice %4 {offsets = [0, 64], sizes = [8, 16], strides = [1, 1]} : vector<8x192xf32> to vector<8x16xf32>
    %8 = arith.truncf %7 : vector<8x16xf32> to vector<8x16xbf16>
    %9 = vector.extract_strided_slice %4 {offsets = [0, 128], sizes = [8, 16], strides = [1, 1]} : vector<8x192xf32> to vector<8x16xf32>
    %10 = arith.truncf %9 : vector<8x16xf32> to vector<8x16xbf16>
    %cst_4 = arith.constant dense<0.000000e+00> : vector<8x8xf32>
    %11 = tpu.matmul %6, %8, %cst_4 {dimension_numbers = #tpu.dot_dimension_numbers<[1], [1], [0], [0], [0, 0, 1, 0], [], []>} : vector<8x16xbf16>, vector<8x16xbf16>, vector<8x8xf32> -> vector<8x8xf32>
    %cst_5 = arith.constant dense<0xFF800000> : vector<8xf32>
    %12 = vector.multi_reduction <maximumf>, %11, %cst_5 [1] : vector<8x8xf32> to vector<8xf32>
    %13 = vector.shape_cast %12 : vector<8xf32> to vector<8x1xf32>
    %14 = vector.broadcast %13 : vector<8x1xf32> to vector<8x8xf32>
    %15 = arith.subf %11, %14 : vector<8x8xf32>
    %16 = math.exp %15 : vector<8x8xf32>
    %cst_6 = arith.constant dense<0.000000e+00> : vector<8xf32>
    %17 = vector.multi_reduction <add>, %16, %cst_6 [1] : vector<8x8xf32> to vector<8xf32>
    %18 = vector.shape_cast %17 : vector<8xf32> to vector<8x1xf32>
    %19 = tpu.reciprocal %18 {approx = true} : vector<8x1xf32> -> vector<8x1xf32>
    %20 = vector.broadcast %19 : vector<8x1xf32> to vector<8x8xf32>
    %21 = arith.mulf %16, %20 : vector<8x8xf32>
    %22 = arith.truncf %21 : vector<8x8xf32> to vector<8x8xbf16>
    %cst_7 = arith.constant dense<0.000000e+00> : vector<8x16xf32>
    %23 = tpu.matmul %22, %10, %cst_7 {dimension_numbers = #tpu.dot_dimension_numbers<[1], [0], [0], [1], [0, 0, 1, 1], [], []>} : vector<8x8xbf16>, vector<8x16xbf16>, vector<8x16xf32> -> vector<8x16xf32>
    %24 = vector.extract_strided_slice %4 {offsets = [0, 16], sizes = [8, 16], strides = [1, 1]} : vector<8x192xf32> to vector<8x16xf32>
    %25 = arith.truncf %24 : vector<8x16xf32> to vector<8x16xbf16>
    %26 = vector.extract_strided_slice %4 {offsets = [0, 80], sizes = [8, 16], strides = [1, 1]} : vector<8x192xf32> to vector<8x16xf32>
    %27 = arith.truncf %26 : vector<8x16xf32> to vector<8x16xbf16>
    %28 = vector.extract_strided_slice %4 {offsets = [0, 144], sizes = [8, 16], strides = [1, 1]} : vector<8x192xf32> to vector<8x16xf32>
    %29 = arith.truncf %28 : vector<8x16xf32> to vector<8x16xbf16>
    %cst_8 = arith.constant dense<0.000000e+00> : vector<8x8xf32>
    %30 = tpu.matmul %25, %27, %cst_8 {dimension_numbers = #tpu.dot_dimension_numbers<[1], [1], [0], [0], [0, 0, 1, 0], [], []>} : vector<8x16xbf16>, vector<8x16xbf16>, vector<8x8xf32> -> vector<8x8xf32>
    %cst_9 = arith.constant dense<0xFF800000> : vector<8xf32>
    %31 = vector.multi_reduction <maximumf>, %30, %cst_9 [1] : vector<8x8xf32> to vector<8xf32>
    %32 = vector.shape_cast %31 : vector<8xf32> to vector<8x1xf32>
    %33 = vector.broadcast %32 : vector<8x1xf32> to vector<8x8xf32>
    %34 = arith.subf %30, %33 : vector<8x8xf32>
    %35 = math.exp %34 : vector<8x8xf32>
    %cst_10 = arith.constant dense<0.000000e+00> : vector<8xf32>
    %36 = vector.multi_reduction <add>, %35, %cst_10 [1] : vector<8x8xf32> to vector<8xf32>
    %37 = vector.shape_cast %36 : vector<8xf32> to vector<8x1xf32>
    %38 = tpu.reciprocal %37 {approx = true} : vector<8x1xf32> -> vector<8x1xf32>
    %39 = vector.broadcast %38 : vector<8x1xf32> to vector<8x8xf32>
    %40 = arith.mulf %35, %39 : vector<8x8xf32>
    %41 = arith.truncf %40 : vector<8x8xf32> to vector<8x8xbf16>
    %cst_11 = arith.constant dense<0.000000e+00> : vector<8x16xf32>
    %42 = tpu.matmul %41, %29, %cst_11 {dimension_numbers = #tpu.dot_dimension_numbers<[1], [0], [0], [1], [0, 0, 1, 1], [], []>} : vector<8x8xbf16>, vector<8x16xbf16>, vector<8x16xf32> -> vector<8x16xf32>
    %43 = vector.extract_strided_slice %4 {offsets = [0, 32], sizes = [8, 16], strides = [1, 1]} : vector<8x192xf32> to vector<8x16xf32>
    %44 = arith.truncf %43 : vector<8x16xf32> to vector<8x16xbf16>
    %45 = vector.extract_strided_slice %4 {offsets = [0, 96], sizes = [8, 16], strides = [1, 1]} : vector<8x192xf32> to vector<8x16xf32>
    %46 = arith.truncf %45 : vector<8x16xf32> to vector<8x16xbf16>
    %47 = vector.extract_strided_slice %4 {offsets = [0, 160], sizes = [8, 16], strides = [1, 1]} : vector<8x192xf32> to vector<8x16xf32>
    %48 = arith.truncf %47 : vector<8x16xf32> to vector<8x16xbf16>
    %cst_12 = arith.constant dense<0.000000e+00> : vector<8x8xf32>
    %49 = tpu.matmul %44, %46, %cst_12 {dimension_numbers = #tpu.dot_dimension_numbers<[1], [1], [0], [0], [0, 0, 1, 0], [], []>} : vector<8x16xbf16>, vector<8x16xbf16>, vector<8x8xf32> -> vector<8x8xf32>
    %cst_13 = arith.constant dense<0xFF800000> : vector<8xf32>
    %50 = vector.multi_reduction <maximumf>, %49, %cst_13 [1] : vector<8x8xf32> to vector<8xf32>
    %51 = vector.shape_cast %50 : vector<8xf32> to vector<8x1xf32>
    %52 = vector.broadcast %51 : vector<8x1xf32> to vector<8x8xf32>
    %53 = arith.subf %49, %52 : vector<8x8xf32>
    %54 = math.exp %53 : vector<8x8xf32>
    %cst_14 = arith.constant dense<0.000000e+00> : vector<8xf32>
    %55 = vector.multi_reduction <add>, %54, %cst_14 [1] : vector<8x8xf32> to vector<8xf32>
    %56 = vector.shape_cast %55 : vector<8xf32> to vector<8x1xf32>
    %57 = tpu.reciprocal %56 {approx = true} : vector<8x1xf32> -> vector<8x1xf32>
    %58 = vector.broadcast %57 : vector<8x1xf32> to vector<8x8xf32>
    %59 = arith.mulf %54, %58 : vector<8x8xf32>
    %60 = arith.truncf %59 : vector<8x8xf32> to vector<8x8xbf16>
    %cst_15 = arith.constant dense<0.000000e+00> : vector<8x16xf32>
    %61 = tpu.matmul %60, %48, %cst_15 {dimension_numbers = #tpu.dot_dimension_numbers<[1], [0], [0], [1], [0, 0, 1, 1], [], []>} : vector<8x8xbf16>, vector<8x16xbf16>, vector<8x16xf32> -> vector<8x16xf32>
    %62 = vector.extract_strided_slice %4 {offsets = [0, 48], sizes = [8, 16], strides = [1, 1]} : vector<8x192xf32> to vector<8x16xf32>
    %63 = arith.truncf %62 : vector<8x16xf32> to vector<8x16xbf16>
    %64 = vector.extract_strided_slice %4 {offsets = [0, 112], sizes = [8, 16], strides = [1, 1]} : vector<8x192xf32> to vector<8x16xf32>
    %65 = arith.truncf %64 : vector<8x16xf32> to vector<8x16xbf16>
    %66 = vector.extract_strided_slice %4 {offsets = [0, 176], sizes = [8, 16], strides = [1, 1]} : vector<8x192xf32> to vector<8x16xf32>
    %67 = arith.truncf %66 : vector<8x16xf32> to vector<8x16xbf16>
    %cst_16 = arith.constant dense<0.000000e+00> : vector<8x8xf32>
    %68 = tpu.matmul %63, %65, %cst_16 {dimension_numbers = #tpu.dot_dimension_numbers<[1], [1], [0], [0], [0, 0, 1, 0], [], []>} : vector<8x16xbf16>, vector<8x16xbf16>, vector<8x8xf32> -> vector<8x8xf32>
    %cst_17 = arith.constant dense<0xFF800000> : vector<8xf32>
    %69 = vector.multi_reduction <maximumf>, %68, %cst_17 [1] : vector<8x8xf32> to vector<8xf32>
    %70 = vector.shape_cast %69 : vector<8xf32> to vector<8x1xf32>
    %71 = vector.broadcast %70 : vector<8x1xf32> to vector<8x8xf32>
    %72 = arith.subf %68, %71 : vector<8x8xf32>
    %73 = math.exp %72 : vector<8x8xf32>
    %cst_18 = arith.constant dense<0.000000e+00> : vector<8xf32>
    %74 = vector.multi_reduction <add>, %73, %cst_18 [1] : vector<8x8xf32> to vector<8xf32>
    %75 = vector.shape_cast %74 : vector<8xf32> to vector<8x1xf32>
    %76 = tpu.reciprocal %75 {approx = true} : vector<8x1xf32> -> vector<8x1xf32>
    %77 = vector.broadcast %76 : vector<8x1xf32> to vector<8x8xf32>
    %78 = arith.mulf %73, %77 : vector<8x8xf32>
    %79 = arith.truncf %78 : vector<8x8xf32> to vector<8x8xbf16>
    %cst_19 = arith.constant dense<0.000000e+00> : vector<8x16xf32>
    %80 = tpu.matmul %79, %67, %cst_19 {dimension_numbers = #tpu.dot_dimension_numbers<[1], [0], [0], [1], [0, 0, 1, 1], [], []>} : vector<8x8xbf16>, vector<8x16xbf16>, vector<8x16xf32> -> vector<8x16xf32>
    %81 = tpu.concatenate %23, %42, %61, %80 in 1 : vector<8x16xf32>, vector<8x16xf32>, vector<8x16xf32>, vector<8x16xf32> -> vector<8x64xf32>
    %82 = arith.truncf %81 : vector<8x64xf32> to vector<8x64xbf16>
    %c0_20 = arith.constant 0 : index
    %c0_21 = arith.constant 0 : index
    %83 = vector.load %arg3[%c0_20, %c0_21] : memref<64x32xbf16, #tpu.memory_space<vmem>>, vector<64x32xbf16>
    %cst_22 = arith.constant dense<0.000000e+00> : vector<8x32xf32>
    %84 = tpu.matmul %82, %83, %cst_22 {dimension_numbers = #tpu.dot_dimension_numbers<[1], [0], [0], [1], [0, 0, 1, 1], [], []>} : vector<8x64xbf16>, vector<64x32xbf16>, vector<8x32xf32> -> vector<8x32xf32>
    %85 = vector.shape_cast %84 : vector<8x32xf32> to vector<1x8x32xf32>
    %c0_23 = arith.constant 0 : index
    %c0_24 = arith.constant 0 : index
    %c0_25 = arith.constant 0 : index
    %86 = vector.load %arg4[%c0_23, %c0_24, %c0_25] : memref<1x8x32xf32, #tpu.memory_space<vmem>>, vector<1x8x32xf32>
    tpu.vector_store %arg4[%c0_23, %c0_24, %c0_25], %85 {strides = array<i32>} : memref<1x8x32xf32, #tpu.memory_space<vmem>>, vector<1x8x32xf32>,
    return
  }
  func.func @transform_0(%arg0: i32) -> (i32, i32, i32) {
    %c0_i32 = arith.constant 0 : i32
    %c0_i32_0 = arith.constant 0 : i32
    %c0_i32_1 = arith.constant 0 : i32
    return %arg0, %c0_i32, %c0_i32_0 : i32, i32, i32
  }
  func.func @transform_1(%arg0: i32) -> (i32, i32) {
    %c0_i32 = arith.constant 0 : i32
    %c0_i32_0 = arith.constant 0 : i32
    %c0_i32_1 = arith.constant 0 : i32
    return %c0_i32, %c0_i32_0 : i32, i32
  }
  func.func @transform_2(%arg0: i32) -> (i32, i32) {
    %c0_i32 = arith.constant 0 : i32
    %c0_i32_0 = arith.constant 0 : i32
    %c0_i32_1 = arith.constant 0 : i32
    return %c0_i32, %c0_i32_0 : i32, i32
  }
  func.func @transform_3(%arg0: i32) -> (i32, i32, i32) {
    %c0_i32 = arith.constant 0 : i32
    %c0_i32_0 = arith.constant 0 : i32
    %c0_i32_1 = arith.constant 0 : i32
    return %arg0, %c0_i32, %c0_i32_0 : i32, i32, i32
  }
}

</mosaic_0001>

<llo_original>
// kernel: tpu_custom_call.1
$region0: #{tpu_custom_call.1}
  #allocation0 [shape = 'u32[]', space=smem, size = 0x4, offset = 0x4, fixed_abs, tag = 'smem constant byte address 0x4 - core index']
  #allocation1 [shape = 'u32[144,128]{1,0:T(1,128)}', space=vmem, size = 0x12000, scoped, tag = 'internal scratch']
  %s0 = inlined_call_operand.vmem [shape: f32[2,8,32], index: 0, kind: input, shape index: {}]
  %s1 = inlined_call_operand.vmem [shape: bf16[32,192], index: 1, kind: input, shape index: {}]
  %s2 = inlined_call_operand.vmem [shape: bf16[64,32], index: 2, kind: input, shape index: {}]
  %s3 = inlined_call_operand.hbm [shape: f32[2,8,32], index: 3, kind: output, shape index: {}]
  %s4 = sld [smem:[#allocation0]]
  $region45: #{tpu_custom_call.1} parent=0
    _
  %s6 = ssub.s32 1, %s4
  %s7 = scalar_select 0, %s6, %s4
  $region1: #{tpu_custom_call.1} parent=0
    #allocation2 [shape = 'u8[8192]{0}', space=vmem, size = 0x2000, scoped, tag = 'output window, operand 0']
    #allocation3 [shape = 's32[2]{0}', space=sflag, size = 0x8, scoped, tag = 'scoped memory for tpu_custom_call.1']
    %8 = vsyncpa [#allocation3], 0
    %s9 = scalar_lea.sflag [#allocation3], 1
    %10 = vsyncpa %s9, 0
    loop: start=0, step=1, limit=4
    $region2: #{tpu_custom_call.1} parent=1 // loop_pre_header
      _
    $region3: #{tpu_custom_call.1} parent=1 // loop_header
      %s12 = sphi 0, %s16
      %p13 = scmp.ge.s32.totalorder %s12, 4
      %s22 = sphi 0, %s24
      %s25 = sphi 0, %s22
      %s26 = sphi 0, %s25
      %s42 = sphi 0, %s26
      %s46 = sphi 0, %s46
      %s48 = sphi 0, %s46
      %s49 = sphi 0, %s48
      %s63 = sphi 0, %s49
      %s67 = sphi 0, %s67
      %s69 = sphi 0, %s67
      %s70 = sphi 0, %s69
      %s84 = sphi 0, %s70
      %s90 = sphi 0, %s92
      %s93 = sphi 0, %s90
      %s94 = sphi 0, %s93
      %s110 = sphi 0, %s94
    $region4: #{tpu_custom_call.1} parent=1 // loop_header_branch
      %15 = sbr.rel (%p13) target = $region8
    $region5: #{tpu_custom_call.1} parent=1 // loop_body
      %s17 = ssub.s32 %s12, 1
      %s18 = ssub.s32 %s12, 2
      %s19 = sadd.s32 %s12, 1
      %s20 = ssub.s32 %s12, %s19
      %p21 = scmp.eq.s32.totalorder %s20, 0
      %s23 = sadd.s32 %s22, 1
      %s24 = scalar_select %p21, %s22, %s23
      %p27 = pneg %p21
      %p28 = scmp.eq.s32.totalorder %s12, 1
      %p29 = por %p27, %p28
      %p30 = scmp.ne.s32.totalorder %s22, %s25
      %p31 = scmp.eq.s32.totalorder %s12, 0
      %p32 = por %p30, %p31
      %p33 = scmp.ne.s32.totalorder %s22, %s25
      %p34 = scmp.eq.s32.totalorder %s17, 1
      %p35 = por %p33, %p34
      %p36 = scmp.ne.s32.totalorder %s25, %s26
      %p37 = scmp.eq.s32.totalorder %s17, 0
      %p38 = por %p36, %p37
      %p39 = scmp.ne.s32.totalorder %s25, %s26
      %p40 = scmp.eq.s32.totalorder %s18, 1
      %p41 = por %p39, %p40
      %p43 = scmp.ne.s32.totalorder %s26, %s42
      %p44 = scmp.eq.s32.totalorder %s18, 0
      %p45 = por %p43, %p44
      %s47 = sadd.s32 %s46, 1
      %p50 = scmp.eq.s32.totalorder %s12, 1
      %p51 = scmp.ne.s32.totalorder %s46, %s48
      %p52 = scmp.eq.s32.totalorder %s12, 0
      %p53 = por %p51, %p52
      %p54 = scmp.ne.s32.totalorder %s46, %s48
      %p55 = scmp.eq.s32.totalorder %s17, 1
      %p56 = por %p54, %p55
      %p57 = scmp.ne.s32.totalorder %s48, %s49
      %p58 = scmp.eq.s32.totalorder %s17, 0
      %p59 = por %p57, %p58
      %p60 = scmp.ne.s32.totalorder %s48, %s49
      %p61 = scmp.eq.s32.totalorder %s18, 1
      %p62 = por %p60, %p61
      %p64 = scmp.ne.s32.totalorder %s49, %s63
      %p65 = scmp.eq.s32.totalorder %s18, 0
      %p66 = por %p64, %p65
      %s68 = sadd.s32 %s67, 1
      %p71 = scmp.eq.s32.totalorder %s12, 1
      %p72 = scmp.ne.s32.totalorder %s67, %s69
      %p73 = scmp.eq.s32.totalorder %s12, 0
      %p74 = por %p72, %p73
      %p75 = scmp.ne.s32.totalorder %s67, %s69
      %p76 = scmp.eq.s32.totalorder %s17, 1
      %p77 = por %p75, %p76
      %p78 = scmp.ne.s32.totalorder %s69, %s70
      %p79 = scmp.eq.s32.totalorder %s17, 0
      %p80 = por %p78, %p79
      %p81 = scmp.ne.s32.totalorder %s69, %s70
      %p82 = scmp.eq.s32.totalorder %s18, 1
      %p83 = por %p81, %p82
      %p85 = scmp.ne.s32.totalorder %s70, %s84
      %p86 = scmp.eq.s32.totalorder %s18, 0
      %p87 = por %p85, %p86
      %s88 = ssub.s32 %s12, %s19
      %p89 = scmp.eq.s32.totalorder %s88, 0
      %s91 = sadd.s32 %s90, 1
      %s92 = scalar_select %p89, %s90, %s91
      %p95 = pneg %p89
      %p96 = scmp.eq.s32.totalorder %s12, 1
      %p97 = por %p95, %p96
      %p98 = scmp.ne.s32.totalorder %s90, %s93
      %p99 = scmp.eq.s32.totalorder %s12, 0
      %p100 = por %p98, %p99
      %p101 = scmp.ne.s32.totalorder %s90, %s93
      %p102 = scmp.eq.s32.totalorder %s17, 1
      %p103 = por %p101, %p102
      %p104 = scmp.ne.s32.totalorder %s93, %s94
      %p105 = scmp.eq.s32.totalorder %s17, 0
      %p106 = por %p104, %p105
      %p107 = scmp.ne.s32.totalorder %s93, %s94
      %p108 = scmp.eq.s32.totalorder %s18, 1
      %p109 = por %p107, %p108
      %p111 = scmp.ne.s32.totalorder %s94, %s110
      %p112 = scmp.eq.s32.totalorder %s18, 0
      %p113 = por %p111, %p112
      %p114 = scmp.le.s32.totalorder 1, %s12
      %p115 = scmp.lt.s32.totalorder %s12, 3
      %p116 = pnand %p114, %p115
      %p117 = pneg %p116
      // Predicated region
      $region9: #{tpu_custom_call.1} parent=5 // pred_check
        _
      $region10: #{tpu_custom_call.1} parent=5 // pred_check_branch
        %119 = sbr.rel (%p116) target = $region12
      $region11: #{tpu_custom_call.1} parent=5 // pred_region
        %s120 = ssub.s32 %s12, 1
        // Predicated region
        $region13: #{tpu_custom_call.1} parent=11 // pred_check
          %p121 = pneg %p59
        $region14: #{tpu_custom_call.1} parent=11 // pred_check_branch
          %123 = sbr.rel (%p121) target = $region16
        $region15: #{tpu_custom_call.1} parent=11 // pred_region
          _
        $region16: #{tpu_custom_call.1} parent=11 // pred_fallthru
          _
        // Predicated region
        $region17: #{tpu_custom_call.1} parent=11 // pred_check
          %p124 = pneg %p80
        $region18: #{tpu_custom_call.1} parent=11 // pred_check_branch
          %126 = sbr.rel (%p124) target = $region20
        $region19: #{tpu_custom_call.1} parent=11 // pred_region
          _
        $region20: #{tpu_custom_call.1} parent=11 // pred_fallthru
          _
      $region12: #{tpu_custom_call.1} parent=5 // pred_fallthru
        _
      %p127 = scmp.lt.s32.totalorder %s12, 2
      // Predicated region
      $region21: #{tpu_custom_call.1} parent=5 // pred_check
        %p128 = pneg %p127
      $region22: #{tpu_custom_call.1} parent=5 // pred_check_branch
        %130 = sbr.rel (%p128) target = $region24
      $region23: #{tpu_custom_call.1} parent=5 // pred_region
        // Predicated region
        $region25: #{tpu_custom_call.1} parent=23 // pred_check
          %p131 = pneg %p32
        $region26: #{tpu_custom_call.1} parent=23 // pred_check_branch
          %133 = sbr.rel (%p131) target = $region28
        $region27: #{tpu_custom_call.1} parent=23 // pred_region
          %p134 = scmp.lt.s32.totalorder %s12, 1
          %s135 = scalar_select %p134, %s12, 1
          %s136 = smul.addr %s135, 8
          %s137 = scalar_lea.vmem %s0, %s136
        $region28: #{tpu_custom_call.1} parent=23 // pred_fallthru
          _
      $region24: #{tpu_custom_call.1} parent=5 // pred_fallthru
        _
      %p138 = scmp.le.s32.totalorder 1, %s12
      %p139 = scmp.lt.s32.totalorder %s12, 3
      %p140 = pnand %p138, %p139
      %p141 = pneg %p140
      // Predicated region
      $region29: #{tpu_custom_call.1} parent=5 // pred_check
        _
      $region30: #{tpu_custom_call.1} parent=5 // pred_check_branch
        %143 = sbr.rel (%p140) target = $region32
      $region31: #{tpu_custom_call.1} parent=5 // pred_region
        %s144 = ssub.s32 %s12, 1
        %p145 = scmp.lt.s32.totalorder %s17, 1
        %s146 = scalar_select %p145, %s17, 1
        %s147 = smul.addr %s146, 8
        %s148 = scalar_lea.vmem %s0, %s147
        %p149 = pneg %p38
        %p150 = pneg %p35
        %p151 = pneg %p59
        %p152 = pneg %p56
        %p153 = pneg %p80
        %p154 = pneg %p77
        %p155 = pneg %p106
        %p156 = pneg %p103
        %s157 = sand.u32 %s93, 1
        %s158 = scalar_lea.sflag [#allocation3], %s157
        %s159 = sand.u32 %s93, 1
        %s160 = smul.addr %s159, 8
        %s161 = scalar_lea.vmem [#allocation2], %s160
        %p162 = scmp.lt.s32.totalorder %s17, 1
        %s163 = scalar_select %p162, %s17, 1
        %s164 = smul.addr %s163, 8
        %s165 = scalar_lea.vmem %s0, %s164
        %v167 = vld [vmem:[%s165] sm:$0xff]
        %v168 = vpack.c.bf16 %v167, %v167
        %v169 = vld [vmem:[%s1] sm:$0xff]
        %v170 = vld [vmem:[%s1 + $0x8] sm:$0xff]
        %v171 = vld [vmem:[%s1 + $0x10] sm:$0xff]
        %v172 = vld [vmem:[%s1 + $0x18] sm:$0xff]
        %v177 = vunpack.c.l.b16 %v169
        %v178 = vunpack.c.h.b16 %v169
        %v179 = vunpack.c.l.b16 %v170
        %v180 = vunpack.c.h.b16 %v170
        %v181 = vunpack.c.l.b16 %v171
        %v182 = vunpack.c.h.b16 %v171
        %v183 = vunpack.c.l.b16 %v172
        %v184 = vunpack.c.h.b16 %v172
        %v185 = vpack.c.b16 %v179, %v177
        %v186 = vpack.c.b16 %v180, %v178
        %v187 = vpack.c.b16 %v183, %v181
        %v188 = vpack.c.b16 %v184, %v182
        %vm193 = vcmask 261120
        %v195 = vsel %vm193, %v168, 0
        %197 = vmatprep.subr.bf16.mxu0 0
        %198 = vmatpush1.bf16.msra.mxu0 0
        %199 = vmatprep.subr.bf16.mxu0 0
        %200 = vmatpush1.bf16.msra.mxu0 0
        %201 = vmatprep.subr.bf16.mxu0 0
        %202 = vmatpush1.bf16.msra.mxu0 0
        %203 = vmatprep.subr.bf16.mxu0 0
        %204 = vmatpush1.bf16.msra.mxu0 0
        %205 = vmatprep.subr.bf16.mxu0 0
        %206 = vmatpush1.bf16.msra.mxu0 0
        %207 = vmatprep.subr.bf16.mxu0 0
        %208 = vmatpush1.bf16.msra.mxu0 0
        %209 = vmatprep.subr.bf16.mxu0 %v188
        %210 = vmatpush1.bf16.msra.mxu0 %v187
        %211 = vmatprep.subr.bf16.mxu0 %v186
        %212 = vmatpush1.bf16.msra.mxu0 %v185
        %213 = vmatprep.subr.bf16.mxu0 0
        %214 = vmatpush2.bf16.msra.mxu0 0
        %215 = vmatprep.subr.bf16.mxu0 0
        %216 = vmatpush2.bf16.msra.mxu0 0
        %217 = vmatprep.subr.bf16.mxu0 0
        %218 = vmatpush2.bf16.msra.mxu0 0
        %219 = vmatprep.subr.bf16.mxu0 0
        %220 = vmatpush2.bf16.msra.mxu0 0
        %221 = vmatprep.subr.bf16.mxu0 0
        %222 = vmatpush2.bf16.msra.mxu0 0
        %223 = vmatprep.subr.bf16.mxu0 0
        %224 = vmatpush2.bf16.msra.mxu0 0
        %225 = vmatprep.subr.bf16.mxu0 0
        %226 = vmatpush2.bf16.msra.mxu0 0
        %227 = vmatprep.subr.bf16.mxu0 0
        %228 = vmatpush2.bf16.msra.mxu0 0
        %229 = vmatprep.mubr.bf16.mxu0 0
        %230 = vmatmul.mubr.bf16.gmra.mxu0 %v195
        %v231 = vpop.f32.mrf.mxu0
        %v232 = vadd.f32 0.0, %v231
        %v233 = vpop.f32.mrf.mxu0
        %v234 = vadd.f32 0.0, %v233
        %v235 = vpop.f32.mrf.mxu0
        %v236 = vpop.f32.mrf.mxu0
        %237 = vdwg.mxu0
        %v238 = vpack.c.bf16 %v232, %v232
        %v239 = vpack.c.bf16 %v234, %v234
        %241 = vrot.lane.b32.xlu0 %v238, 64
        %v242 = vpop.permute.xlu0 %241
        %vm243 = vcmask 130048
        %v245 = vsel %vm243, %v238, 0
        %v248 = vsel %vm243, %v242, 0
        %250 = vmatprep.subr.bf16.mxu0 0
        %251 = vmatpush1.bf16.xpose.msra.mxu0 0
        %252 = vmatprep.subr.bf16.mxu0 0
        %253 = vmatpush1.bf16.xpose.msra.mxu0 0
        %254 = vmatprep.subr.bf16.mxu0 0
        %255 = vmatpush1.bf16.xpose.msra.mxu0 0
        %256 = vmatprep.subr.bf16.mxu0 0
        %257 = vmatpush1.bf16.xpose.msra.mxu0 0
        %258 = vmatprep.subr.bf16.mxu0 0
        %259 = vmatpush1.bf16.xpose.msra.mxu0 0
        %260 = vmatprep.subr.bf16.mxu0 0
        %261 = vmatpush1.bf16.xpose.msra.mxu0 0
        %262 = vmatprep.subr.bf16.mxu0 0
        %263 = vmatpush1.bf16.xpose.msra.mxu0 0
        %264 = vmatprep.subr.bf16.mxu0 0
        %265 = vmatpush1.bf16.xpose.msra.mxu0 %v248
        %266 = vmatprep.subr.bf16.mxu0 0
        %267 = vmatpush2.bf16.xpose.msra.mxu0 0
        %268 = vmatprep.subr.bf16.mxu0 0
        %269 = vmatpush2.bf16.xpose.msra.mxu0 0
        %270 = vmatprep.subr.bf16.mxu0 0
        %271 = vmatpush2.bf16.xpose.msra.mxu0 0
        %272 = vmatprep.subr.bf16.mxu0 0
        %273 = vmatpush2.bf16.xpose.msra.mxu0 0
        %274 = vmatprep.subr.bf16.mxu0 0
        %275 = vmatpush2.bf16.xpose.msra.mxu0 0
        %276 = vmatprep.subr.bf16.mxu0 0
        %277 = vmatpush2.bf16.xpose.msra.mxu0 0
        %278 = vmatprep.subr.bf16.mxu0 0
        %279 = vmatpush2.bf16.xpose.msra.mxu0 0
        %280 = vmatprep.subr.bf16.mxu0 0
        %281 = vmatpush2.bf16.xpose.msra.mxu0 0
        %282 = vmatprep.mubr.bf16.mxu0 0
        %283 = vmatmul.mubr.bf16.gmra.mxu0 %v245
        %v284 = vpop.f32.mrf.mxu0
        %v285 = vadd.f32 0.0, %v284
        %v286 = vpop.f32.mrf.mxu0
        %v287 = vpop.f32.mrf.mxu0
        %v288 = vpop.f32.mrf.mxu0
        %289 = vdwg.mxu0
        %vm290 = vcmask 64512
        %v291 = vsel %vm290, %v285, -inf
        %292 = vmax.xlane.f32.xlu0 %v291
        %v293 = vpop.xlane.xlu0 %292
        %v294 = vsub.f32 %v285, %v293
        %v295 = vmul.f32 %v294, 1.442695
        %v296 = vpow.pop %v295
        %v297 = vsel %vm290, %v296, 0.0
        %298 = vadd.xlane.f32.xlu0 %v297
        %v299 = vpop.xlane.xlu0 %298
        %v300 = vrcp.pop %v299
        %v301 = vmul.f32 %v296, %v300
        %v302 = vpack.c.bf16 %v301, %v301
        %v304 = vsel %vm290, %v302, 0
        %vm306 = vcmask 1043456
        %v308 = vsel %vm306, %v239, 0
        %310 = vmatprep.subr.bf16.mxu0 0
        %311 = vmatpush1.bf16.msra.mxu0 0
        %312 = vmatprep.subr.bf16.mxu0 0
        %313 = vmatpush1.bf16.msra.mxu0 0
        %314 = vmatprep.subr.bf16.mxu0 0
        %315 = vmatpush1.bf16.msra.mxu0 0
        %316 = vmatprep.subr.bf16.mxu0 0
        %317 = vmatpush1.bf16.msra.mxu0 0
        %318 = vmatprep.subr.bf16.mxu0 0
        %319 = vmatpush1.bf16.msra.mxu0 0
        %320 = vmatprep.subr.bf16.mxu0 0
        %321 = vmatpush1.bf16.msra.mxu0 0
        %322 = vmatprep.subr.bf16.mxu0 0
        %323 = vmatpush1.bf16.msra.mxu0 0
        %324 = vmatprep.subr.bf16.mxu0 0
        %325 = vmatpush1.bf16.msra.mxu0 %v308
        %326 = vmatprep.subr.bf16.mxu0 0
        %327 = vmatpush2.bf16.msra.mxu0 0
        %328 = vmatprep.subr.bf16.mxu0 0
        %329 = vmatpush2.bf16.msra.mxu0 0
        %330 = vmatprep.subr.bf16.mxu0 0
        %331 = vmatpush2.bf16.msra.mxu0 0
        %332 = vmatprep.subr.bf16.mxu0 0
        %333 = vmatpush2.bf16.msra.mxu0 0
        %334 = vmatprep.subr.bf16.mxu0 0
        %335 = vmatpush2.bf16.msra.mxu0 0
        %336 = vmatprep.subr.bf16.mxu0 0
        %337 = vmatpush2.bf16.msra.mxu0 0
        %338 = vmatprep.subr.bf16.mxu0 0
        %339 = vmatpush2.bf16.msra.mxu0 0
        %340 = vmatprep.subr.bf16.mxu0 0
        %341 = vmatpush2.bf16.msra.mxu0 0
        %342 = vmatprep.mubr.bf16.mxu0 0
        %343 = vmatmul.mubr.bf16.gmra.mxu0 %v304
        %v344 = vpop.f32.mrf.mxu0
        %v345 = vadd.f32 0.0, %v344
        %v346 = vpop.f32.mrf.mxu0
        %v347 = vpop.f32.mrf.mxu0
        %v348 = vpop.f32.mrf.mxu0
        %349 = vdwg.mxu0
        %350 = vrot.lane.b32.xlu0 %v238, 112
        %v351 = vpop.permute.xlu0 %350
        %352 = vrot.lane.b32.xlu0 %v238, 48
        %v353 = vpop.permute.xlu0 %352
        %v355 = vsel %vm243, %v351, 0
        %v358 = vsel %vm243, %v353, 0
        %360 = vmatprep.subr.bf16.mxu0 0
        %361 = vmatpush1.bf16.xpose.msra.mxu0 0
        %362 = vmatprep.subr.bf16.mxu0 0
        %363 = vmatpush1.bf16.xpose.msra.mxu0 0
        %364 = vmatprep.subr.bf16.mxu0 0
        %365 = vmatpush1.bf16.xpose.msra.mxu0 0
        %366 = vmatprep.subr.bf16.mxu0 0
        %367 = vmatpush1.bf16.xpose.msra.mxu0 0
        %368 = vmatprep.subr.bf16.mxu0 0
        %369 = vmatpush1.bf16.xpose.msra.mxu0 0
        %370 = vmatprep.subr.bf16.mxu0 0
        %371 = vmatpush1.bf16.xpose.msra.mxu0 0
        %372 = vmatprep.subr.bf16.mxu0 0
        %373 = vmatpush1.bf16.xpose.msra.mxu0 0
        %374 = vmatprep.subr.bf16.mxu0 0
        %375 = vmatpush1.bf16.xpose.msra.mxu0 %v358
        %376 = vmatprep.subr.bf16.mxu0 0
        %377 = vmatpush2.bf16.xpose.msra.mxu0 0
        %378 = vmatprep.subr.bf16.mxu0 0
        %379 = vmatpush2.bf16.xpose.msra.mxu0 0
        %380 = vmatprep.subr.bf16.mxu0 0
        %381 = vmatpush2.bf16.xpose.msra.mxu0 0
        %382 = vmatprep.subr.bf16.mxu0 0
        %383 = vmatpush2.bf16.xpose.msra.mxu0 0
        %384 = vmatprep.subr.bf16.mxu0 0
        %385 = vmatpush2.bf16.xpose.msra.mxu0 0
        %386 = vmatprep.subr.bf16.mxu0 0
        %387 = vmatpush2.bf16.xpose.msra.mxu0 0
        %388 = vmatprep.subr.bf16.mxu0 0
        %389 = vmatpush2.bf16.xpose.msra.mxu0 0
        %390 = vmatprep.subr.bf16.mxu0 0
        %391 = vmatpush2.bf16.xpose.msra.mxu0 0
        %392 = vmatprep.mubr.bf16.mxu0 0
        %393 = vmatmul.mubr.bf16.gmra.mxu0 %v355
        %v394 = vpop.f32.mrf.mxu0
        %v395 = vadd.f32 0.0, %v394
        %v396 = vpop.f32.mrf.mxu0
        %v397 = vpop.f32.mrf.mxu0
        %v398 = vpop.f32.mrf.mxu0
        %399 = vdwg.mxu0
        %v400 = vsel %vm290, %v395, -inf
        %401 = vmax.xlane.f32.xlu0 %v400
        %v402 = vpop.xlane.xlu0 %401
        %v403 = vsub.f32 %v395, %v402
        %v404 = vmul.f32 %v403, 1.442695
        %v405 = vpow.pop %v404
        %v406 = vsel %vm290, %v405, 0.0
        %407 = vadd.xlane.f32.xlu0 %v406
        %v408 = vpop.xlane.xlu0 %407
        %v409 = vrcp.pop %v408
        %v410 = vmul.f32 %v405, %v409
        %v411 = vpack.c.bf16 %v410, %v410
        %413 = vrot.lane.b32.xlu0 %v239, 112
        %v414 = vpop.permute.xlu0 %413
        %v416 = vsel %vm290, %v411, 0
        %v419 = vsel %vm306, %v414, 0
        %421 = vmatprep.subr.bf16.mxu0 0
        %422 = vmatpush1.bf16.msra.mxu0 0
        %423 = vmatprep.subr.bf16.mxu0 0
        %424 = vmatpush1.bf16.msra.mxu0 0
        %425 = vmatprep.subr.bf16.mxu0 0
        %426 = vmatpush1.bf16.msra.mxu0 0
        %427 = vmatprep.subr.bf16.mxu0 0
        %428 = vmatpush1.bf16.msra.mxu0 0
        %429 = vmatprep.subr.bf16.mxu0 0
        %430 = vmatpush1.bf16.msra.mxu0 0
        %431 = vmatprep.subr.bf16.mxu0 0
        %432 = vmatpush1.bf16.msra.mxu0 0
        %433 = vmatprep.subr.bf16.mxu0 0
        %434 = vmatpush1.bf16.msra.mxu0 0
        %435 = vmatprep.subr.bf16.mxu0 0
        %436 = vmatpush1.bf16.msra.mxu0 %v419
        %437 = vmatprep.subr.bf16.mxu0 0
        %438 = vmatpush2.bf16.msra.mxu0 0
        %439 = vmatprep.subr.bf16.mxu0 0
        %440 = vmatpush2.bf16.msra.mxu0 0
        %441 = vmatprep.subr.bf16.mxu0 0
        %442 = vmatpush2.bf16.msra.mxu0 0
        %443 = vmatprep.subr.bf16.mxu0 0
        %444 = vmatpush2.bf16.msra.mxu0 0
        %445 = vmatprep.subr.bf16.mxu0 0
        %446 = vmatpush2.bf16.msra.mxu0 0
        %447 = vmatprep.subr.bf16.mxu0 0
        %448 = vmatpush2.bf16.msra.mxu0 0
        %449 = vmatprep.subr.bf16.mxu0 0
        %450 = vmatpush2.bf16.msra.mxu0 0
        %451 = vmatprep.subr.bf16.mxu0 0
        %452 = vmatpush2.bf16.msra.mxu0 0
        %453 = vmatprep.mubr.bf16.mxu0 0
        %454 = vmatmul.mubr.bf16.gmra.mxu0 %v416
        %v455 = vpop.f32.mrf.mxu0
        %v456 = vadd.f32 0.0, %v455
        %v457 = vpop.f32.mrf.mxu0
        %v458 = vpop.f32.mrf.mxu0
        %v459 = vpop.f32.mrf.mxu0
        %460 = vdwg.mxu0
        %461 = vrot.lane.b32.xlu0 %v238, 96
        %v462 = vpop.permute.xlu0 %461
        %463 = vrot.lane.b32.xlu0 %v238, 32
        %v464 = vpop.permute.xlu0 %463
        %v466 = vsel %vm243, %v462, 0
        %v469 = vsel %vm243, %v464, 0
        %471 = vmatprep.subr.bf16.mxu0 0
        %472 = vmatpush1.bf16.xpose.msra.mxu0 0
        %473 = vmatprep.subr.bf16.mxu0 0
        %474 = vmatpush1.bf16.xpose.msra.mxu0 0
        %475 = vmatprep.subr.bf16.mxu0 0
        %476 = vmatpush1.bf16.xpose.msra.mxu0 0
        %477 = vmatprep.subr.bf16.mxu0 0
        %478 = vmatpush1.bf16.xpose.msra.mxu0 0
        %479 = vmatprep.subr.bf16.mxu0 0
        %480 = vmatpush1.bf16.xpose.msra.mxu0 0
        %481 = vmatprep.subr.bf16.mxu0 0
        %482 = vmatpush1.bf16.xpose.msra.mxu0 0
        %483 = vmatprep.subr.bf16.mxu0 0
        %484 = vmatpush1.bf16.xpose.msra.mxu0 0
        %485 = vmatprep.subr.bf16.mxu0 0
        %486 = vmatpush1.bf16.xpose.msra.mxu0 %v469
        %487 = vmatprep.subr.bf16.mxu0 0
        %488 = vmatpush2.bf16.xpose.msra.mxu0 0
        %489 = vmatprep.subr.bf16.mxu0 0
        %490 = vmatpush2.bf16.xpose.msra.mxu0 0
        %491 = vmatprep.subr.bf16.mxu0 0
        %492 = vmatpush2.bf16.xpose.msra.mxu0 0
        %493 = vmatprep.subr.bf16.mxu0 0
        %494 = vmatpush2.bf16.xpose.msra.mxu0 0
        %495 = vmatprep.subr.bf16.mxu0 0
        %496 = vmatpush2.bf16.xpose.msra.mxu0 0
        %497 = vmatprep.subr.bf16.mxu0 0
        %498 = vmatpush2.bf16.xpose.msra.mxu0 0
        %499 = vmatprep.subr.bf16.mxu0 0
        %500 = vmatpush2.bf16.xpose.msra.mxu0 0
        %501 = vmatprep.subr.bf16.mxu0 0
        %502 = vmatpush2.bf16.xpose.msra.mxu0 0
        %503 = vmatprep.mubr.bf16.mxu0 0
        %504 = vmatmul.mubr.bf16.gmra.mxu0 %v466
        %v505 = vpop.f32.mrf.mxu0
        %v506 = vadd.f32 0.0, %v505
        %v507 = vpop.f32.mrf.mxu0
        %v508 = vpop.f32.mrf.mxu0
        %v509 = vpop.f32.mrf.mxu0
        %510 = vdwg.mxu0
        %v511 = vsel %vm290, %v506, -inf
        %512 = vmax.xlane.f32.xlu0 %v511
        %v513 = vpop.xlane.xlu0 %512
        %v514 = vsub.f32 %v506, %v513
        %v515 = vmul.f32 %v514, 1.442695
        %v516 = vpow.pop %v515
        %v517 = vsel %vm290, %v516, 0.0
        %518 = vadd.xlane.f32.xlu0 %v517
        %v519 = vpop.xlane.xlu0 %518
        %v520 = vrcp.pop %v519
        %v521 = vmul.f32 %v516, %v520
        %v522 = vpack.c.bf16 %v521, %v521
        %523 = vrot.lane.b32.xlu0 %v239, 96
        %v524 = vpop.permute.xlu0 %523
        %v526 = vsel %vm290, %v522, 0
        %v529 = vsel %vm306, %v524, 0
        %531 = vmatprep.subr.bf16.mxu0 0
        %532 = vmatpush1.bf16.msra.mxu0 0
        %533 = vmatprep.subr.bf16.mxu0 0
        %534 = vmatpush1.bf16.msra.mxu0 0
        %535 = vmatprep.subr.bf16.mxu0 0
        %536 = vmatpush1.bf16.msra.mxu0 0
        %537 = vmatprep.subr.bf16.mxu0 0
        %538 = vmatpush1.bf16.msra.mxu0 0
        %539 = vmatprep.subr.bf16.mxu0 0
        %540 = vmatpush1.bf16.msra.mxu0 0
        %541 = vmatprep.subr.bf16.mxu0 0
        %542 = vmatpush1.bf16.msra.mxu0 0
        %543 = vmatprep.subr.bf16.mxu0 0
        %544 = vmatpush1.bf16.msra.mxu0 0
        %545 = vmatprep.subr.bf16.mxu0 0
        %546 = vmatpush1.bf16.msra.mxu0 %v529
        %547 = vmatprep.subr.bf16.mxu0 0
        %548 = vmatpush2.bf16.msra.mxu0 0
        %549 = vmatprep.subr.bf16.mxu0 0
        %550 = vmatpush2.bf16.msra.mxu0 0
        %551 = vmatprep.subr.bf16.mxu0 0
        %552 = vmatpush2.bf16.msra.mxu0 0
        %553 = vmatprep.subr.bf16.mxu0 0
        %554 = vmatpush2.bf16.msra.mxu0 0
        %555 = vmatprep.subr.bf16.mxu0 0
        %556 = vmatpush2.bf16.msra.mxu0 0
        %557 = vmatprep.subr.bf16.mxu0 0
        %558 = vmatpush2.bf16.msra.mxu0 0
        %559 = vmatprep.subr.bf16.mxu0 0
        %560 = vmatpush2.bf16.msra.mxu0 0
        %561 = vmatprep.subr.bf16.mxu0 0
        %562 = vmatpush2.bf16.msra.mxu0 0
        %563 = vmatprep.mubr.bf16.mxu0 0
        %564 = vmatmul.mubr.bf16.gmra.mxu0 %v526
        %v565 = vpop.f32.mrf.mxu0
        %v566 = vadd.f32 0.0, %v565
        %v567 = vpop.f32.mrf.mxu0
        %v568 = vpop.f32.mrf.mxu0
        %v569 = vpop.f32.mrf.mxu0
        %570 = vdwg.mxu0
        %571 = vrot.lane.b32.xlu0 %v238, 80
        %v572 = vpop.permute.xlu0 %571
        %573 = vrot.lane.b32.xlu0 %v238, 16
        %v574 = vpop.permute.xlu0 %573
        %v576 = vsel %vm243, %v572, 0
        %v579 = vsel %vm243, %v574, 0
        %581 = vmatprep.subr.bf16.mxu0 0
        %582 = vmatpush1.bf16.xpose.msra.mxu0 0
        %583 = vmatprep.subr.bf16.mxu0 0
        %584 = vmatpush1.bf16.xpose.msra.mxu0 0
        %585 = vmatprep.subr.bf16.mxu0 0
        %586 = vmatpush1.bf16.xpose.msra.mxu0 0
        %587 = vmatprep.subr.bf16.mxu0 0
        %588 = vmatpush1.bf16.xpose.msra.mxu0 0
        %589 = vmatprep.subr.bf16.mxu0 0
        %590 = vmatpush1.bf16.xpose.msra.mxu0 0
        %591 = vmatprep.subr.bf16.mxu0 0
        %592 = vmatpush1.bf16.xpose.msra.mxu0 0
        %593 = vmatprep.subr.bf16.mxu0 0
        %594 = vmatpush1.bf16.xpose.msra.mxu0 0
        %595 = vmatprep.subr.bf16.mxu0 0
        %596 = vmatpush1.bf16.xpose.msra.mxu0 %v579
        %597 = vmatprep.subr.bf16.mxu0 0
        %598 = vmatpush2.bf16.xpose.msra.mxu0 0
        %599 = vmatprep.subr.bf16.mxu0 0
        %600 = vmatpush2.bf16.xpose.msra.mxu0 0
        %601 = vmatprep.subr.bf16.mxu0 0
        %602 = vmatpush2.bf16.xpose.msra.mxu0 0
        %603 = vmatprep.subr.bf16.mxu0 0
        %604 = vmatpush2.bf16.xpose.msra.mxu0 0
        %605 = vmatprep.subr.bf16.mxu0 0
        %606 = vmatpush2.bf16.xpose.msra.mxu0 0
        %607 = vmatprep.subr.bf16.mxu0 0
        %608 = vmatpush2.bf16.xpose.msra.mxu0 0
        %609 = vmatprep.subr.bf16.mxu0 0
        %610 = vmatpush2.bf16.xpose.msra.mxu0 0
        %611 = vmatprep.subr.bf16.mxu0 0
        %612 = vmatpush2.bf16.xpose.msra.mxu0 0
        %613 = vmatprep.mubr.bf16.mxu0 0
        %614 = vmatmul.mubr.bf16.gmra.mxu0 %v576
        %v615 = vpop.f32.mrf.mxu0
        %v616 = vadd.f32 0.0, %v615
        %v617 = vpop.f32.mrf.mxu0
        %v618 = vpop.f32.mrf.mxu0
        %v619 = vpop.f32.mrf.mxu0
        %620 = vdwg.mxu0
        %v621 = vsel %vm290, %v616, -inf
        %622 = vmax.xlane.f32.xlu0 %v621
        %v623 = vpop.xlane.xlu0 %622
        %v624 = vsub.f32 %v616, %v623
        %v625 = vmul.f32 %v624, 1.442695
        %v626 = vpow.pop %v625
        %v627 = vsel %vm290, %v626, 0.0
        %628 = vadd.xlane.f32.xlu0 %v627
        %v629 = vpop.xlane.xlu0 %628
        %v630 = vrcp.pop %v629
        %v631 = vmul.f32 %v626, %v630
        %v632 = vpack.c.bf16 %v631, %v631
        %633 = vrot.lane.b32.xlu0 %v239, 80
        %v634 = vpop.permute.xlu0 %633
        %v636 = vsel %vm290, %v632, 0
        %v639 = vsel %vm306, %v634, 0
        %641 = vmatprep.subr.bf16.mxu0 0
        %642 = vmatpush1.bf16.msra.mxu0 0
        %643 = vmatprep.subr.bf16.mxu0 0
        %644 = vmatpush1.bf16.msra.mxu0 0
        %645 = vmatprep.subr.bf16.mxu0 0
        %646 = vmatpush1.bf16.msra.mxu0 0
        %647 = vmatprep.subr.bf16.mxu0 0
        %648 = vmatpush1.bf16.msra.mxu0 0
        %649 = vmatprep.subr.bf16.mxu0 0
        %650 = vmatpush1.bf16.msra.mxu0 0
        %651 = vmatprep.subr.bf16.mxu0 0
        %652 = vmatpush1.bf16.msra.mxu0 0
        %653 = vmatprep.subr.bf16.mxu0 0
        %654 = vmatpush1.bf16.msra.mxu0 0
        %655 = vmatprep.subr.bf16.mxu0 0
        %656 = vmatpush1.bf16.msra.mxu0 %v639
        %657 = vmatprep.subr.bf16.mxu0 0
        %658 = vmatpush2.bf16.msra.mxu0 0
        %659 = vmatprep.subr.bf16.mxu0 0
        %660 = vmatpush2.bf16.msra.mxu0 0
        %661 = vmatprep.subr.bf16.mxu0 0
        %662 = vmatpush2.bf16.msra.mxu0 0
        %663 = vmatprep.subr.bf16.mxu0 0
        %664 = vmatpush2.bf16.msra.mxu0 0
        %665 = vmatprep.subr.bf16.mxu0 0
        %666 = vmatpush2.bf16.msra.mxu0 0
        %667 = vmatprep.subr.bf16.mxu0 0
        %668 = vmatpush2.bf16.msra.mxu0 0
        %669 = vmatprep.subr.bf16.mxu0 0
        %670 = vmatpush2.bf16.msra.mxu0 0
        %671 = vmatprep.subr.bf16.mxu0 0
        %672 = vmatpush2.bf16.msra.mxu0 0
        %673 = vmatprep.mubr.bf16.mxu0 0
        %674 = vmatmul.mubr.bf16.gmra.mxu0 %v636
        %v675 = vpop.f32.mrf.mxu0
        %v676 = vadd.f32 0.0, %v675
        %v677 = vpop.f32.mrf.mxu0
        %v678 = vpop.f32.mrf.mxu0
        %v679 = vpop.f32.mrf.mxu0
        %680 = vdwg.mxu0
        %682 = vrot.lane.b32.xlu0 %v456, 16
        %v683 = vpop.permute.xlu0 %682
        %686 = vrot.lane.b32.xlu0 %v566, 32
        %v687 = vpop.permute.xlu0 %686
        %690 = vrot.lane.b32.xlu0 %v676, 48
        %v691 = vpop.permute.xlu0 %690
        %v693 = vsel %vm243, %v345, %v683
        %v694 = vsel %vm193, %v693, %v687
        %vm695 = vcmask 392192
        %v696 = vsel %vm695, %v694, %v691
        %v697 = vpack.c.bf16 %v696, %v696
        %v698 = vld [vmem:[%s2] sm:$0xf]
        %v699 = vld [vmem:[%s2 + $0x4] sm:$0xf]
        %v700 = vld [vmem:[%s2 + $0x8] sm:$0xf]
        %v701 = vld [vmem:[%s2 + $0xc] sm:$0xf]
        %v702 = vld [vmem:[%s2 + $0x10] sm:$0xf]
        %v703 = vld [vmem:[%s2 + $0x14] sm:$0xf]
        %v704 = vld [vmem:[%s2 + $0x18] sm:$0xf]
        %v705 = vld [vmem:[%s2 + $0x1c] sm:$0xf]
        %v714 = vunpack.c.l.b16 %v698
        %v715 = vunpack.c.l.b16 %v699
        %v716 = vunpack.c.l.b16 %v700
        %v717 = vunpack.c.l.b16 %v701
        %v718 = vunpack.c.l.b16 %v702
        %v719 = vunpack.c.l.b16 %v703
        %v720 = vunpack.c.l.b16 %v704
        %v721 = vunpack.c.l.b16 %v705
        %v722 = vpack.c.b16 %v715, %v714
        %v723 = vpack.c.b16 %v717, %v716
        %v724 = vpack.c.b16 %v719, %v718
        %v725 = vpack.c.b16 %v721, %v720
        %vm730 = vcmask 523264
        %v732 = vsel %vm730, %v697, 0
        %734 = vmatprep.subr.bf16.mxu0 0
        %735 = vmatpush1.bf16.msra.mxu0 0
        %736 = vmatprep.subr.bf16.mxu0 0
        %737 = vmatpush1.bf16.msra.mxu0 0
        %738 = vmatprep.subr.bf16.mxu0 0
        %739 = vmatpush1.bf16.msra.mxu0 0
        %740 = vmatprep.subr.bf16.mxu0 0
        %741 = vmatpush1.bf16.msra.mxu0 0
        %742 = vmatprep.subr.bf16.mxu0 0
        %743 = vmatpush1.bf16.msra.mxu0 %v725
        %744 = vmatprep.subr.bf16.mxu0 0
        %745 = vmatpush1.bf16.msra.mxu0 %v724
        %746 = vmatprep.subr.bf16.mxu0 0
        %747 = vmatpush1.bf16.msra.mxu0 %v723
        %748 = vmatprep.subr.bf16.mxu0 0
        %749 = vmatpush1.bf16.msra.mxu0 %v722
        %750 = vmatprep.subr.bf16.mxu0 0
        %751 = vmatpush2.bf16.msra.mxu0 0
        %752 = vmatprep.subr.bf16.mxu0 0
        %753 = vmatpush2.bf16.msra.mxu0 0
        %754 = vmatprep.subr.bf16.mxu0 0
        %755 = vmatpush2.bf16.msra.mxu0 0
        %756 = vmatprep.subr.bf16.mxu0 0
        %757 = vmatpush2.bf16.msra.mxu0 0
        %758 = vmatprep.subr.bf16.mxu0 0
        %759 = vmatpush2.bf16.msra.mxu0 0
        %760 = vmatprep.subr.bf16.mxu0 0
        %761 = vmatpush2.bf16.msra.mxu0 0
        %762 = vmatprep.subr.bf16.mxu0 0
        %763 = vmatpush2.bf16.msra.mxu0 0
        %764 = vmatprep.subr.bf16.mxu0 0
        %765 = vmatpush2.bf16.msra.mxu0 0
        %766 = vmatprep.mubr.bf16.mxu0 0
        %767 = vmatmul.mubr.bf16.gmra.mxu0 %v732
        %v768 = vpop.f32.mrf.mxu0
        %v769 = vadd.f32 0.0, %v768
        %v770 = vpop.f32.mrf.mxu0
        %v771 = vpop.f32.mrf.mxu0
        %v772 = vpop.f32.mrf.mxu0
        %773 = vdwg.mxu0
        %774 = vst.msk [vmem:[%s161] sm:$0xff] %vm193, %v769
        %s775 = sand.u32 %s93, 1
        %s776 = scalar_lea.sflag [#allocation3], %s775
        %s777 = sand.u32 %s93, 1
        %s778 = smul.addr %s777, 8
        %s779 = scalar_lea.vmem [#allocation2], %s778
        // Predicated region
        $region33: #{tpu_custom_call.1} parent=31 // pred_check
          %p780 = pneg %p103
        $region34: #{tpu_custom_call.1} parent=31 // pred_check_branch
          %782 = sbr.rel (%p780) target = $region36
        $region35: #{tpu_custom_call.1} parent=31 // pred_region
          %s784 = ssub.s32 128, 128
          %785 = vsyncadd %s776, %s784
          %s786 = smul.addr %s17, 128
          %s787 = scalar_lea.hbm %s3, %s786
          %s789 = sshll.u32 %s779, 4
          %s790 = int_to_ptr.vmem [resolvable:$true] %s789
          %792 = dma.vmem_to_hbm [thread:$0]  %s790, 128, %s787, %s776
        $region36: #{tpu_custom_call.1} parent=31 // pred_fallthru
          _
      $region32: #{tpu_custom_call.1} parent=5 // pred_fallthru
        _
      %p793 = scmp.le.s32.totalorder 2, %s12
      // Predicated region
      $region37: #{tpu_custom_call.1} parent=5 // pred_check
        %p794 = pneg %p793
      $region38: #{tpu_custom_call.1} parent=5 // pred_check_branch
        %796 = sbr.rel (%p794) target = $region40
      $region39: #{tpu_custom_call.1} parent=5 // pred_region
        %s797 = ssub.s32 %s12, 2
        // Predicated region
        $region41: #{tpu_custom_call.1} parent=39 // pred_check
          %p798 = pneg %p109
        $region42: #{tpu_custom_call.1} parent=39 // pred_check_branch
          %800 = sbr.rel (%p798) target = $region44
        $region43: #{tpu_custom_call.1} parent=39 // pred_region
          %s801 = sand.u32 %s94, 1
          %s802 = scalar_lea.sflag [#allocation3], %s801
          %s803 = sand.u32 %s94, 1
          %s804 = smul.addr %s803, 8
          %s805 = scalar_lea.vmem [#allocation2], %s804
          %806 = dma.done %s802, 128
        $region44: #{tpu_custom_call.1} parent=39 // pred_fallthru
          _
      $region40: #{tpu_custom_call.1} parent=5 // pred_fallthru
        _
    $region6: #{tpu_custom_call.1} parent=1 // loop_footer
      %s16 = sadd.s32 1, %s12
    $region7: #{tpu_custom_call.1} parent=1 // loop_footer_branch
      %11 = sbr.rel target = $region3
    $region8: #{tpu_custom_call.1} parent=1 // loop_exit
      _
    %807 = vsyncpa [#allocation3], 1
    %s808 = scalar_lea.sflag [#allocation3], 1
    %809 = vsyncpa %s808, 1

</llo_original>
